<compile_context>
chip_gen: v7x
topology: tpu7x:2x2x1
jax: 0.10.0
libtpu: 0.0.40
codegen_flags: <defaults>
</compile_context>

<pallas_src>
import math

import jax
import jax.numpy as jnp
from jax.experimental import pallas as pl
from jax.experimental.pallas import tpu as pltpu


_C0 = math.sqrt(2.0 / math.pi)          # sqrt(2/pi)
_C1 = _C0 * 0.044715                    # folded: sqrt(2/pi) * 0.044715


def _gelu_kernel(x_ref, o_ref):
    x = x_ref[...]
    xf = x.astype(jnp.float32)          # f32 intermediates (in-register only)
    x2 = xf * xf
    # GELU(x) = 0.5*x*(1 + tanh( x*(C0 + C1*x^2) ))  ==  reference formula
    inner = xf * (_C0 + _C1 * x2)
    y = 0.5 * xf * (1.0 + jnp.tanh(inner))
    o_ref[...] = y.astype(o_ref.dtype)


def _default_block_bytes() -> int:
    """8 MiB input blocks by default; 4 MiB on v5e (larger blocks gain <1-2%)."""
    try:
        kind = jax.devices()[0].device_kind.lower()
    except Exception:
        return 8 << 20
    if "v5 lite" in kind or "v5e" in kind or "v5litepod" in kind:
        return 4 << 20
    return 8 << 20


def _choose_lane_width(total: int):
    """Largest W (multiple of 128) that divides the element count exactly."""
    for cand in (8192, 4096, 2048, 1024, 512, 256, 128):
        if total % cand == 0:
            return cand
    return None


def gelu(x: jax.Array, *, block_bytes: int | None = None) -> jax.Array:
    """Tanh-approximation GELU computed in a Pallas TPU kernel.

    Elementwise: output shape/dtype == input shape/dtype. Works for any rank.
    `block_bytes` targets the size of one *input* block in VMEM; the
    double-buffered in+out footprint is ~4x this.
    """
    orig_shape = x.shape
    orig_dtype = x.dtype
    total = int(math.prod(orig_shape)) if orig_shape else 1
    if total == 0:
        return x
    itemsize = jnp.dtype(orig_dtype).itemsize
    # Native sublane tile: 8 rows for f32, 16 for bf16, 32 for int8/fp8.
    sublane = max(8, 32 // max(1, itemsize))
    if block_bytes is None:
        block_bytes = _default_block_bytes()

    # ---- choose the 2-D view --------------------------------------------
    W = _choose_lane_width(total)
    if W is not None:
        rows = total // W                              # lane-dense, unmasked vst
    else:
        # Element count not a multiple of 128: keep the natural last dim and
        # let Pallas emit masked stores on it.  No pad, no slice, no extra
        # HBM passes.
        W = orig_shape[-1] if x.ndim >= 1 else 1
        rows = total // W
    x2d = x.reshape(rows, W)

    # ---- tile selection ---------------------------------------------------
    row_bytes = W * itemsize
    total_bytes = total * itemsize
    MIN_STEPS = 4                                      # keep both v7x TCs busy

    if row_bytes <= block_bytes:
        tw = W                                         # full last dim per block
        budget_rows = max(sublane, (block_bytes // row_bytes) // sublane * sublane)
        if rows > budget_rows:
            tm = budget_rows                           # VMEM-budgeted row tile
        elif total_bytes >= (1 << 20) and rows >= MIN_STEPS * sublane:
            # Mid-size input: split into >= MIN_STEPS steps for cross-TC
            # parallelism and DMA/compute overlap (never one giant block).
            tm = max(sublane, (pl.cdiv(rows, MIN_STEPS) // sublane) * sublane)
        else:
            tm = rows                                  # tiny input: one block
    else:
        # Pathological: a single row exceeds the budget -> tile columns too
        # (column tile is a multiple of 128; ragged tail is masked by Pallas).
        tw = max(128, (block_bytes // (sublane * itemsize)) // 128 * 128)
        tm = sublane

    grid = (pl.cdiv(rows, tm), pl.cdiv(W, tw))

    # Keep default Buffered(2) pipelining; budget: 2 bufs * (in + out) * block.
    vmem_limit = min(96 << 20, 4 * tm * tw * itemsize + (16 << 20))

    out2d = pl.pallas_call(
        _gelu_kernel,
        out_shape=jax.ShapeDtypeStruct((rows, W), orig_dtype),
        grid_spec=pltpu.PrefetchScalarGridSpec(
            num_scalar_prefetch=0,
            grid=grid,
            in_specs=[pl.BlockSpec((tm, tw), lambda i, j: (i, j))],
            out_specs=pl.BlockSpec((tm, tw), lambda i, j: (i, j)),
        ),
        compiler_params=pltpu.CompilerParams(
            # TODO(synk): if "parallel" does not shard the row grid across
            # v7x's 2 TensorCores, switch to pltpu.CORE_PARALLEL on axis 0.
            dimension_semantics=("parallel", "parallel"),
            vmem_limit_bytes=vmem_limit,
        ),
    )(x2d)

    return out2d.reshape(orig_shape)


def _gelu_reference(x):
    xf = x.astype(jnp.float32)
    y = 0.5 * xf * (1.0 + jnp.tanh(_C0 * (xf + 0.044715 * jnp.power(xf, 3))))
    return y.astype(x.dtype)


if __name__ == "__main__":
    key = jax.random.PRNGKey(0)

    # Shapes consistent with transformer usage: (batch=2, seq=8, hidden=32).
    x = jax.random.normal(key, (2, 8, 32), dtype=jnp.float32)
    y = jax.block_until_ready(gelu(x))
    y_ref = _gelu_reference(x)
    assert y.shape == x.shape and y.dtype == x.dtype
    assert jnp.allclose(y, y_ref, atol=1e-5, rtol=1e-5), "mismatch vs reference"

    # Non-128-divisible element count -> masked full-last-dim path (no pad).
    x2 = jax.random.normal(jax.random.PRNGKey(1), (3, 7, 33), dtype=jnp.float32)
    y2 = jax.block_until_ready(gelu(x2))
    assert y2.shape == x2.shape and y2.dtype == x2.dtype
    assert jnp.allclose(y2, _gelu_reference(x2), atol=1e-5, rtol=1e-5), \
        "mismatch vs reference (masked path)"

    # Mid-size input (2 MiB) -> multi-step grid (>= 4 steps) path.
    x3 = jax.random.normal(jax.random.PRNGKey(2), (256, 2048), dtype=jnp.float32)
    y3 = jax.block_until_ready(gelu(x3))
    assert jnp.allclose(y3, _gelu_reference(x3), atol=1e-5, rtol=1e-5), \
        "mismatch vs reference (multi-step path)"

    # bf16 I/O with f32 intermediates.
    x4 = jax.random.normal(jax.random.PRNGKey(3), (2, 8, 32), dtype=jnp.bfloat16)
    y4 = jax.block_until_ready(gelu(x4))
    assert y4.dtype == jnp.bfloat16
    assert jnp.allclose(y4.astype(jnp.float32),
                        _gelu_reference(x4).astype(jnp.float32),
                        atol=2e-2, rtol=2e-2), "mismatch vs reference (bf16)"

    print("KERNEL_OK")
</pallas_src>

<mosaic_0001>
module attributes {stable_mosaic.version = 11 : i64} {
  func.func @_gelu_kernel(%arg0: i32, %arg1: i32, %arg2: memref<1x512xf32, #tpu.memory_space<vmem>>, %arg3: memref<1x512xf32, #tpu.memory_space<vmem>>) attributes {dimension_semantics = [#tpu.dimension_semantics<parallel>, #tpu.dimension_semantics<parallel>], iteration_bounds = array<i64: 1, 1>, scalar_prefetch = 0 : i64, scratch_operands = 0 : i64, tpu.core_type = #tpu.core_type<tc>, window_params = [{transform_indices = @transform_0, window_bounds = array<i64: 1, 512>}, {transform_indices = @transform_1, window_bounds = array<i64: 1, 512>}]} {
    %c0 = arith.constant 0 : index
    %c0_0 = arith.constant 0 : index
    %0 = vector.load %arg2[%c0, %c0_0] : memref<1x512xf32, #tpu.memory_space<vmem>>, vector<1x512xf32>
    %1 = arith.mulf %0, %0 : vector<1x512xf32>
    %cst = arith.constant 0.0356774069 : f32
    %2 = vector.broadcast %cst : f32 to vector<1x512xf32>
    %3 = arith.mulf %2, %1 : vector<1x512xf32>
    %cst_1 = arith.constant 0.797884583 : f32
    %4 = vector.broadcast %cst_1 : f32 to vector<1x512xf32>
    %5 = arith.addf %4, %3 : vector<1x512xf32>
    %6 = arith.mulf %0, %5 : vector<1x512xf32>
    %cst_2 = arith.constant 5.000000e-01 : f32
    %7 = vector.broadcast %cst_2 : f32 to vector<1x512xf32>
    %8 = arith.mulf %7, %0 : vector<1x512xf32>
    %9 = math.tanh %6 : vector<1x512xf32>
    %cst_3 = arith.constant 1.000000e+00 : f32
    %10 = vector.broadcast %cst_3 : f32 to vector<1x512xf32>
    %11 = arith.addf %10, %9 : vector<1x512xf32>
    %12 = arith.mulf %8, %11 : vector<1x512xf32>
    %c0_4 = arith.constant 0 : index
    %c0_5 = arith.constant 0 : index
    %13 = vector.load %arg3[%c0_4, %c0_5] : memref<1x512xf32, #tpu.memory_space<vmem>>, vector<1x512xf32>
    tpu.vector_store %arg3[%c0_4, %c0_5], %12 {strides = array<i32>} : memref<1x512xf32, #tpu.memory_space<vmem>>, vector<1x512xf32>,
    return
  }
  func.func @transform_0(%arg0: i32, %arg1: i32) -> (i32, i32) {
    %c0_i32 = arith.constant 0 : i32
    return %arg0, %arg1 : i32, i32
  }
  func.func @transform_1(%arg0: i32, %arg1: i32) -> (i32, i32) {
    %c0_i32 = arith.constant 0 : i32
    return %arg0, %arg1 : i32, i32
  }
}

</mosaic_0001>

<llo_original>
// kernel: tpu_custom_call.1
$region0: #{tpu_custom_call.1}
  #allocation0 [shape = 'u32[]', space=smem, size = 0x4, offset = 0x4, fixed_abs, tag = 'smem constant byte address 0x4 - core index']
  #allocation1 [shape = 'u32[144,128]{1,0:T(1,128)}', space=vmem, size = 0x12000, scoped, tag = 'internal scratch']
  %s0 = inlined_call_operand.hbm [shape: f32[1,512], index: 0, kind: input, shape index: {}]
  %s1 = inlined_call_operand.hbm [shape: f32[1,512], index: 1, kind: output, shape index: {}]
  %s2 = sld [smem:[#allocation0]]
  $region18: #{tpu_custom_call.1} parent=0
    _
  %s4 = ssub.s32 1, %s2
  %s5 = scalar_select 0, %s4, %s2
  $region1: #{tpu_custom_call.1} parent=0
    #allocation2 [shape = 'u8[2048]{0}', space=vmem, size = 0x800, scoped, tag = 'input window, operand 0, single buffered']
    #allocation3 [shape = 's32[1]{0}', space=sflag, size = 0x4, scoped, tag = 'scoped memory for tpu_custom_call.1']
    #allocation4 [shape = 's32[1]{0}', space=sflag, size = 0x4, scoped, tag = 'scoped memory for tpu_custom_call.1']
    #allocation5 [shape = 'u8[2048]{0}', space=vmem, size = 0x800, scoped, tag = 'output window, operand 0, single buffered']
    %6 = vsyncpa [#allocation3], 0
    %7 = vsyncpa [#allocation4], 0
    // Predicated region
    $region2: #{tpu_custom_call.1} parent=1 // pred_check
      _
    $region3: #{tpu_custom_call.1} parent=1 // pred_check_branch
      %9 = sbr.rel (0) target = $region5
    $region4: #{tpu_custom_call.1} parent=1 // pred_region
      %s11 = ssub.s32 64, 64
      %12 = vsyncadd [#allocation3], %s11
      %s14 = sshll.u32 [#allocation2], 4
      %s15 = int_to_ptr.vmem [resolvable:$true] %s14
      %17 = dma.hbm_to_vmem [thread:$0]  %s0, 64, %s15, [#allocation3]
    $region5: #{tpu_custom_call.1} parent=1 // pred_fallthru
      _
    // Predicated region
    $region6: #{tpu_custom_call.1} parent=1 // pred_check
      _
    $region7: #{tpu_custom_call.1} parent=1 // pred_check_branch
      %19 = sbr.rel (0) target = $region9
    $region8: #{tpu_custom_call.1} parent=1 // pred_region
      %20 = dma.done [#allocation3], 64
    $region9: #{tpu_custom_call.1} parent=1 // pred_fallthru
      _
    %v21 = vld [vmem:[#allocation2] sm:$0xf]
    %v22 = vmul.f32 %v21, %v21
    %v23 = vmul.f32 %v22, 0.035677407
    %v24 = vadd.f32 %v23, 0.7978846
    %v25 = vmul.f32 %v21, %v24
    %v26 = vmul.f32 %v21, 0.5
    %v27 = vtanh.pop %v25
    %v28 = vadd.f32 %v27, 1.0
    %v29 = vmul.f32 %v26, %v28
    %v30 = vlaneseq
    %vm31 = vcmp.ge.s32.totalorder %v30, 0
    %vm32 = vcmp.lt.s32.totalorder %v30, 512
    %vm33 = vmand %vm31, %vm32
    %34 = vst.msk [vmem:[#allocation5] sm:$0xf] %vm33, %v29
    // Predicated region
    $region10: #{tpu_custom_call.1} parent=1 // pred_check
      _
    $region11: #{tpu_custom_call.1} parent=1 // pred_check_branch
      %36 = sbr.rel (0) target = $region13
    $region12: #{tpu_custom_call.1} parent=1 // pred_region
      %s38 = ssub.s32 64, 64
      %39 = vsyncadd [#allocation4], %s38
      %s41 = sshll.u32 [#allocation5], 4
      %s42 = int_to_ptr.vmem [resolvable:$true] %s41
      %44 = dma.vmem_to_hbm [thread:$0]  %s42, 64, %s1, [#allocation4]
    $region13: #{tpu_custom_call.1} parent=1 // pred_fallthru
      _
    // Predicated region
    $region14: #{tpu_custom_call.1} parent=1 // pred_check
      _
    $region15: #{tpu_custom_call.1} parent=1 // pred_check_branch
      %46 = sbr.rel (0) target = $region17
    $region16: #{tpu_custom_call.1} parent=1 // pred_region
      %47 = dma.done [#allocation4], 64
    $region17: #{tpu_custom_call.1} parent=1 // pred_fallthru
      _
    %48 = vsyncpa [#allocation3], 1
    %49 = vsyncpa [#allocation4], 1

</llo_original>
